<compile_context>
chip_gen: v5e
topology: v5e:2x2
jax: 0.10.0
libtpu: 0.0.40
codegen_flags: <defaults>
</compile_context>

<pallas_src>
import functools
import math

import jax
import jax.numpy as jnp
from jax.experimental import pallas as pl
from jax.experimental.pallas import tpu as pltpu

HIDDEN = 256


def _critic_kernel(s_ref, a_ref, w1_ref, b1_ref, w2_ref, b2_ref, w3_ref, b3_ref,
                   out_ref, x_ref, *, state_dim):
    sd = state_dim

    # Fused concat: write state/action into adjacent lane ranges of one VMEM
    # scratch (masked lane stores; XLU/vst slots have slack), then ONE layer-1
    # MXU dot instead of two tiny-K dots.
    x_ref[:, :sd] = s_ref[...]
    x_ref[:, sd:] = a_ref[...]

    # Layer 1 -- bf16 MXU operands, f32 accumulate.
    x = x_ref[...].astype(jnp.bfloat16)
    h1 = jnp.dot(x, w1_ref[...], preferred_element_type=jnp.float32) + b1_ref[...]
    h1 = jnp.maximum(h1, 0.0)                                   # ReLU (f32, VPU)

    # Layer 2 -- 256x256 MXU matmul, bf16 in / f32 accumulate.
    h2 = jnp.dot(h1.astype(jnp.bfloat16), w2_ref[...],
                 preferred_element_type=jnp.float32) + b2_ref[...]
    h2 = jnp.maximum(h2, 0.0)

    # Layer 3 -- output width 1: broadcast-mul + lane reduce (VPU/XLU) instead
    # of an MXU pass with 1/256 output-lane utilization.
    q = jnp.sum(h2 * w3_ref[...], axis=-1, keepdims=True) + b3_ref[...]
    out_ref[...] = q.astype(out_ref.dtype)


def prepare_critic_params(params):
    """One-time prep: cast MXU operands to bf16; reshape W3 for the lane reduce."""
    w1, b1, w2, b2, w3, b3 = params
    w1b = w1.astype(jnp.bfloat16)                    # (sd+ad, H), single-dot layer 1
    w2b = w2.astype(jnp.bfloat16)                    # (H, H)
    w3r = w3.reshape(1, -1).astype(jnp.float32)      # (H,1) -> (1,H); stays f32 (VPU)
    return (w1b, b1, w2b, b2, w3r, b3)


def _pick_tb(B, block_b):
    """Batch tile: <= ~block_b rows, even number of near-equal grid steps
    (v7x megacore balance), multiple of 256 for big tiles / 8 for small ones.
    For B <= 256 use a single full-extent tile (legal regardless of alignment)."""
    if B <= 256:
        return B
    n = max(2, math.ceil(B / block_b))      # grid steps
    if n % 2:
        n += 1                              # even count -> balanced megacore split
    tb = math.ceil(B / (n * 8)) * 8         # near-equal tiles, sublane-aligned
    if tb >= 1024:
        tb = math.ceil(tb / 256) * 256      # big tiles: round to 256
    return tb


def _vmem_limit_bytes(tb, k, h):
    """Per-step VMEM estimate (h1/h2 f32 + bf16 copies dominate) + slack.
    Floor 16 MiB (smallest default), cap 64 MiB (v7x per-TC physical)."""
    act = tb * h * (4 + 4 + 2 + 2)          # h1/h2 f32 + their bf16 MXU copies
    xsc = tb * k * (4 + 2)                  # concat scratch + bf16 cast
    ins = 2 * 2 * tb * k * 4                # double-buffered (state, action) tiles
    out = 2 * tb * 4
    wts = 2 * (k * h * 2 + h * h * 2 + 3 * h * 4 + 4)
    est = act + xsc + ins + out + wts + (4 << 20)
    return int(min(max(est, 16 << 20), 64 << 20))


@functools.partial(jax.jit, static_argnames=("block_b",))
def critic_forward(state, action, prepared, *, block_b=2048):
    """state: [B, state_dim], action: [B, action_dim] -> q: [B, 1] (f32)."""
    w1b, b1, w2b, b2, w3r, b3 = prepared
    B, state_dim = state.shape
    action_dim = action.shape[1]
    K = state_dim + action_dim
    H = b1.shape[1]

    tb = _pick_tb(B, block_b)
    grid = (pl.cdiv(B, tb),)

    def resident(shape):
        # Constant index_map -> block stays VMEM-resident across all grid steps.
        return pl.BlockSpec(shape, lambda i: (0, 0))

    flops = 2 * B * (K * H + H * H + H)
    bytes_accessed = B * (K + 1) * 4 + (K * H + H * H) * 2 + 3 * H * 4 + 4

    kernel = functools.partial(_critic_kernel, state_dim=state_dim)

    # NOTE: the last grid step may be a partial tile; layers compute on padded
    # rows whose results are discarded by the clipped output write (benign --
    # all ops are row-independent; revisit if any cross-row reduction is added).
    return pl.pallas_call(
        kernel,
        out_shape=jax.ShapeDtypeStruct((B, 1), jnp.float32),
        grid=grid,
        in_specs=[
            pl.BlockSpec((tb, state_dim), lambda i: (i, 0)),    # streamed per tile
            pl.BlockSpec((tb, action_dim), lambda i: (i, 0)),   # streamed per tile
            resident((K, H)),                                   # W1 (bf16)
            resident((1, H)),                                   # b1 (f32)
            resident((H, H)),                                   # W2 (bf16)
            resident((1, H)),                                   # b2 (f32)
            resident((1, H)),                                   # W3 row (f32)
            resident((1, 1)),                                   # b3 (f32)
        ],
        out_specs=pl.BlockSpec((tb, 1), lambda i: (i, 0)),
        scratch_shapes=[pltpu.VMEM((tb, K), jnp.float32)],      # fused-concat scratch
        compiler_params=pltpu.CompilerParams(
            dimension_semantics=("parallel",),                  # v7x megacore
            vmem_limit_bytes=_vmem_limit_bytes(tb, K, H)),
        cost_estimate=pl.CostEstimate(flops=flops, transcendentals=0,
                                      bytes_accessed=bytes_accessed),
    )(state, action, w1b, b1, w2b, b2, w3r, b3)


def init_critic_params(key, state_dim, action_dim, hidden=HIDDEN):
    """Mirror nn.Linear default init U(-1/sqrt(fan_in), +1/sqrt(fan_in)).

    Weights are stored [in_features, out_features] (transpose of PyTorch)."""
    dims = [(state_dim + action_dim, hidden), (hidden, hidden), (hidden, 1)]
    params = []
    for fan_in, fan_out in dims:
        key, kw, kb = jax.random.split(key, 3)
        bound = 1.0 / jnp.sqrt(jnp.float32(fan_in))
        w = jax.random.uniform(kw, (fan_in, fan_out), jnp.float32, -bound, bound)
        b = jax.random.uniform(kb, (1, fan_out), jnp.float32, -bound, bound)
        params.extend([w, b])
    return tuple(params)


def critic_reference_f32(state, action, params):
    """Pure-f32 JAX reference (matches the PyTorch module)."""
    w1, b1, w2, b2, w3, b3 = params
    x = jnp.concatenate([state, action], axis=1)
    h1 = jnp.maximum(x @ w1 + b1, 0.0)
    h2 = jnp.maximum(h1 @ w2 + b2, 0.0)
    return h2 @ w3 + b3


def critic_reference_bf16(state, action, params):
    """Reference mirroring the kernel's mixed precision (bf16 MXU, f32 accumulate)."""
    w1, b1, w2, b2, w3, b3 = params
    x = jnp.concatenate([state, action], axis=1).astype(jnp.bfloat16)
    h1 = jnp.dot(x, w1.astype(jnp.bfloat16),
                 preferred_element_type=jnp.float32) + b1
    h1 = jnp.maximum(h1, 0.0)
    h2 = jnp.dot(h1.astype(jnp.bfloat16), w2.astype(jnp.bfloat16),
                 preferred_element_type=jnp.float32) + b2
    h2 = jnp.maximum(h2, 0.0)
    return jnp.sum(h2 * w3.reshape(1, -1), axis=-1, keepdims=True) + b3


if __name__ == "__main__":
    key = jax.random.PRNGKey(0)
    state_dim, action_dim = 17, 6

    # batch=2: small single full-extent tile; batch=600: balanced 2-step grid
    # with a partial last tile (tb=304); batch=2304: exercises the >=1024,
    # multiple-of-256 tile path (tb=1280, 2 steps).
    for batch in (2, 600, 2304):
        k_s, k_a, k_p = jax.random.split(jax.random.fold_in(key, batch), 3)
        state = jax.random.normal(k_s, (batch, state_dim), jnp.float32)
        action = jax.random.normal(k_a, (batch, action_dim), jnp.float32)
        params = init_critic_params(k_p, state_dim, action_dim)
        prepared = prepare_critic_params(params)

        q = critic_forward(state, action, prepared)
        jax.block_until_ready(q)
        assert q.shape == (batch, 1), q.shape

        q_bf16 = critic_reference_bf16(state, action, params)   # same precision recipe
        q_f32 = critic_reference_f32(state, action, params)     # full-precision module
        assert jnp.allclose(q, q_bf16, atol=2e-3, rtol=2e-3), (q, q_bf16)
        assert jnp.allclose(q, q_f32, atol=5e-2, rtol=5e-2), (q, q_f32)

    print("KERNEL_OK")
</pallas_src>

<mosaic_0001>
module attributes {stable_mosaic.version = 11 : i64} {
  func.func @_critic_kernel(%arg0: i32, %arg1: memref<2x17xf32, #tpu.memory_space<vmem>>, %arg2: memref<2x6xf32, #tpu.memory_space<vmem>>, %arg3: memref<23x256xbf16, #tpu.memory_space<vmem>>, %arg4: memref<1x256xf32, #tpu.memory_space<vmem>>, %arg5: memref<256x256xbf16, #tpu.memory_space<vmem>>, %arg6: memref<1x256xf32, #tpu.memory_space<vmem>>, %arg7: memref<1x256xf32, #tpu.memory_space<vmem>>, %arg8: memref<1x1xf32, #tpu.memory_space<vmem>>, %arg9: memref<2x1xf32, #tpu.memory_space<vmem>>, %arg10: memref<2x23xf32, #tpu.memory_space<vmem>>) attributes {dimension_semantics = [#tpu.dimension_semantics<parallel>], iteration_bounds = array<i64: 1>, scalar_prefetch = 0 : i64, scratch_operands = 1 : i64, tpu.core_type = #tpu.core_type<tc>, window_params = [{transform_indices = @transform_0, window_bounds = array<i64: 2, 17>}, {transform_indices = @transform_1, window_bounds = array<i64: 2, 6>}, {pipeline_mode = #tpu.pipeline_mode<synchronous>, transform_indices = @transform_2, window_bounds = array<i64: 23, 256>}, {pipeline_mode = #tpu.pipeline_mode<synchronous>, transform_indices = @transform_3, window_bounds = array<i64: 1, 256>}, {pipeline_mode = #tpu.pipeline_mode<synchronous>, transform_indices = @transform_4, window_bounds = array<i64: 256, 256>}, {pipeline_mode = #tpu.pipeline_mode<synchronous>, transform_indices = @transform_5, window_bounds = array<i64: 1, 256>}, {pipeline_mode = #tpu.pipeline_mode<synchronous>, transform_indices = @transform_6, window_bounds = array<i64: 1, 256>}, {pipeline_mode = #tpu.pipeline_mode<synchronous>, transform_indices = @transform_7, window_bounds = array<i64: 1, 1>}, {transform_indices = @transform_8, window_bounds = array<i64: 2, 1>}]} {
    %c0 = arith.constant 0 : index
    %c0_0 = arith.constant 0 : index
    %0 = vector.load %arg1[%c0, %c0_0] : memref<2x17xf32, #tpu.memory_space<vmem>>, vector<2x17xf32>
    %c0_1 = arith.constant 0 : index
    %c0_2 = arith.constant 0 : index
    %1 = vector.load %arg10[%c0_1, %c0_2] : memref<2x23xf32, #tpu.memory_space<vmem>>, vector<2x17xf32>
    tpu.vector_store %arg10[%c0_1, %c0_2], %0 {strides = array<i32>} : memref<2x23xf32, #tpu.memory_space<vmem>>, vector<2x17xf32>,
    %c0_3 = arith.constant 0 : index
    %c0_4 = arith.constant 0 : index
    %2 = vector.load %arg2[%c0_3, %c0_4] : memref<2x6xf32, #tpu.memory_space<vmem>>, vector<2x6xf32>
    %c0_5 = arith.constant 0 : index
    %c17 = arith.constant 17 : index
    %3 = vector.load %arg10[%c0_5, %c17] : memref<2x23xf32, #tpu.memory_space<vmem>>, vector<2x6xf32>
    tpu.vector_store %arg10[%c0_5, %c17], %2 {strides = array<i32>} : memref<2x23xf32, #tpu.memory_space<vmem>>, vector<2x6xf32>,
    %c0_6 = arith.constant 0 : index
    %c0_7 = arith.constant 0 : index
    %4 = vector.load %arg10[%c0_6, %c0_7] : memref<2x23xf32, #tpu.memory_space<vmem>>, vector<2x23xf32>
    %5 = arith.truncf %4 : vector<2x23xf32> to vector<2x23xbf16>
    %c0_8 = arith.constant 0 : index
    %c0_9 = arith.constant 0 : index
    %6 = vector.load %arg3[%c0_8, %c0_9] : memref<23x256xbf16, #tpu.memory_space<vmem>>, vector<23x256xbf16>
    %cst = arith.constant dense<0.000000e+00> : vector<2x256xf32>
    %7 = tpu.matmul %5, %6, %cst {dimension_numbers = #tpu.dot_dimension_numbers<[1], [0], [0], [1], [0, 0, 1, 1], [], []>} : vector<2x23xbf16>, vector<23x256xbf16>, vector<2x256xf32> -> vector<2x256xf32>
    %c0_10 = arith.constant 0 : index
    %c0_11 = arith.constant 0 : index
    %8 = vector.load %arg4[%c0_10, %c0_11] : memref<1x256xf32, #tpu.memory_space<vmem>>, vector<1x256xf32>
    %9 = vector.broadcast %8 : vector<1x256xf32> to vector<2x256xf32>
    %10 = arith.addf %7, %9 : vector<2x256xf32>
    %cst_12 = arith.constant 0.000000e+00 : f32
    %11 = vector.broadcast %cst_12 : f32 to vector<2x256xf32>
    %12 = arith.maximumf %10, %11 : vector<2x256xf32>
    %13 = arith.truncf %12 : vector<2x256xf32> to vector<2x256xbf16>
    %c0_13 = arith.constant 0 : index
    %c0_14 = arith.constant 0 : index
    %14 = vector.load %arg5[%c0_13, %c0_14] : memref<256x256xbf16, #tpu.memory_space<vmem>>, vector<256x256xbf16>
    %cst_15 = arith.constant dense<0.000000e+00> : vector<2x256xf32>
    %15 = tpu.matmul %13, %14, %cst_15 {dimension_numbers = #tpu.dot_dimension_numbers<[1], [0], [0], [1], [0, 0, 1, 1], [], []>} : vector<2x256xbf16>, vector<256x256xbf16>, vector<2x256xf32> -> vector<2x256xf32>
    %c0_16 = arith.constant 0 : index
    %c0_17 = arith.constant 0 : index
    %16 = vector.load %arg6[%c0_16, %c0_17] : memref<1x256xf32, #tpu.memory_space<vmem>>, vector<1x256xf32>
    %17 = vector.broadcast %16 : vector<1x256xf32> to vector<2x256xf32>
    %18 = arith.addf %15, %17 : vector<2x256xf32>
    %cst_18 = arith.constant 0.000000e+00 : f32
    %19 = vector.broadcast %cst_18 : f32 to vector<2x256xf32>
    %20 = arith.maximumf %18, %19 : vector<2x256xf32>
    %c0_19 = arith.constant 0 : index
    %c0_20 = arith.constant 0 : index
    %21 = vector.load %arg7[%c0_19, %c0_20] : memref<1x256xf32, #tpu.memory_space<vmem>>, vector<1x256xf32>
    %22 = vector.broadcast %21 : vector<1x256xf32> to vector<2x256xf32>
    %23 = arith.mulf %20, %22 : vector<2x256xf32>
    %cst_21 = arith.constant dense<0.000000e+00> : vector<2xf32>
    %24 = vector.multi_reduction <add>, %23, %cst_21 [1] : vector<2x256xf32> to vector<2xf32>
    %25 = vector.shape_cast %24 : vector<2xf32> to vector<2x1xf32>
    %c0_22 = arith.constant 0 : index
    %c0_23 = arith.constant 0 : index
    %26 = vector.load %arg8[%c0_22, %c0_23] : memref<1x1xf32, #tpu.memory_space<vmem>>, vector<1x1xf32>
    %27 = vector.broadcast %26 : vector<1x1xf32> to vector<2x1xf32>
    %28 = arith.addf %25, %27 : vector<2x1xf32>
    %c0_24 = arith.constant 0 : index
    %c0_25 = arith.constant 0 : index
    %29 = vector.load %arg9[%c0_24, %c0_25] : memref<2x1xf32, #tpu.memory_space<vmem>>, vector<2x1xf32>
    tpu.vector_store %arg9[%c0_24, %c0_25], %28 {strides = array<i32>} : memref<2x1xf32, #tpu.memory_space<vmem>>, vector<2x1xf32>,
    return
  }
  func.func @transform_0(%arg0: i32) -> (i32, i32) {
    %c0_i32 = arith.constant 0 : i32
    %c0_i32_0 = arith.constant 0 : i32
    return %arg0, %c0_i32 : i32, i32
  }
  func.func @transform_1(%arg0: i32) -> (i32, i32) {
    %c0_i32 = arith.constant 0 : i32
    %c0_i32_0 = arith.constant 0 : i32
    return %arg0, %c0_i32 : i32, i32
  }
  func.func @transform_2(%arg0: i32) -> (i32, i32) {
    %c0_i32 = arith.constant 0 : i32
    %c0_i32_0 = arith.constant 0 : i32
    %c0_i32_1 = arith.constant 0 : i32
    return %c0_i32, %c0_i32_0 : i32, i32
  }
  func.func @transform_3(%arg0: i32) -> (i32, i32) {
    %c0_i32 = arith.constant 0 : i32
    %c0_i32_0 = arith.constant 0 : i32
    %c0_i32_1 = arith.constant 0 : i32
    return %c0_i32, %c0_i32_0 : i32, i32
  }
  func.func @transform_4(%arg0: i32) -> (i32, i32) {
    %c0_i32 = arith.constant 0 : i32
    %c0_i32_0 = arith.constant 0 : i32
    %c0_i32_1 = arith.constant 0 : i32
    return %c0_i32, %c0_i32_0 : i32, i32
  }
  func.func @transform_5(%arg0: i32) -> (i32, i32) {
    %c0_i32 = arith.constant 0 : i32
    %c0_i32_0 = arith.constant 0 : i32
    %c0_i32_1 = arith.constant 0 : i32
    return %c0_i32, %c0_i32_0 : i32, i32
  }
  func.func @transform_6(%arg0: i32) -> (i32, i32) {
    %c0_i32 = arith.constant 0 : i32
    %c0_i32_0 = arith.constant 0 : i32
    %c0_i32_1 = arith.constant 0 : i32
    return %c0_i32, %c0_i32_0 : i32, i32
  }
  func.func @transform_7(%arg0: i32) -> (i32, i32) {
    %c0_i32 = arith.constant 0 : i32
    %c0_i32_0 = arith.constant 0 : i32
    %c0_i32_1 = arith.constant 0 : i32
    return %c0_i32, %c0_i32_0 : i32, i32
  }
  func.func @transform_8(%arg0: i32) -> (i32, i32) {
    %c0_i32 = arith.constant 0 : i32
    %c0_i32_0 = arith.constant 0 : i32
    return %arg0, %c0_i32 : i32, i32
  }
}

</mosaic_0001>

<llo_original>
// kernel: critic_forward.1
$region0: #{critic_forward.1}
  #allocation0 [shape = 'u32[]', space=smem, size = 0x4, offset = 0x4, fixed_abs, tag = 'smem constant byte address 0x4 - core index']
  #allocation1 [shape = 'u32[72,128]{1,0:T(1,128)}', space=vmem, size = 0x9000, scoped, tag = 'internal scratch']
  #allocation2 [shape = 'f32[2,23]{1,0:T(2,128)}', space=vmem, size = 0x400, scoped, tag = 'scratch operand']
  #allocation3 [shape = 'f32[1,1]{1,0:T(1,128)S(1)}', space=vmem, size = 0x200, scoped, tag = 'scoped memory for critic_forward.1']
  %s0 = inlined_call_operand.vmem [shape: f32[2,17], index: 0, kind: input, shape index: {}]
  %s1 = inlined_call_operand.hbm [shape: f32[2,6], index: 1, kind: input, shape index: {}]
  %s2 = inlined_call_operand.hbm [shape: bf16[23,256], index: 2, kind: input, shape index: {}]
  %s3 = inlined_call_operand.vmem [shape: f32[1,256], index: 3, kind: input, shape index: {}]
  %s4 = inlined_call_operand.hbm [shape: bf16[256,256], index: 4, kind: input, shape index: {}]
  %s5 = inlined_call_operand.vmem [shape: f32[1,256], index: 5, kind: input, shape index: {}]
  %s6 = inlined_call_operand.hbm [shape: f32[1,256], index: 6, kind: input, shape index: {}]
  %s7 = inlined_call_operand.<no memory space> [shape: f32[1,1], index: 7, kind: input, shape index: {}]
  %s8 = inlined_call_operand.vmem [shape: f32[2,1], index: 8, kind: output, shape index: {}]
  %s9 = sld [smem:[#allocation0]]
  $region58: #{critic_forward.1} parent=0
    _
  %s11 = ssub.s32 1, %s9
  %s12 = scalar_select 0, %s11, %s9
  %v13 = vstv %s7
  %14 = vst [vmem:[#allocation3] sm:$0x1] %v13
  $region1: #{critic_forward.1} parent=0
    #allocation4 [shape = 'u8[1024]{0}', space=vmem, size = 0x400, scoped, tag = 'input window, operand 1, single buffered']
    #allocation5 [shape = 's32[1]{0}', space=sflag, size = 0x4, scoped, tag = 'scoped memory for critic_forward.1']
    #allocation6 [shape = 'u8[12288]{0}', space=vmem, size = 0x3000, scoped, tag = 'input window, operand 2, single buffered']
    #allocation7 [shape = 's32[1]{0}', space=sflag, size = 0x4, scoped, tag = 'scoped memory for critic_forward.1']
    #allocation8 [shape = 'u8[131072]{0}', space=vmem, size = 0x20000, scoped, tag = 'input window, operand 4, single buffered']
    #allocation9 [shape = 'u8[1024]{0}', space=vmem, size = 0x400, scoped, tag = 'input window, operand 6, single buffered']
    #allocation10 [shape = 's32[1]{0}', space=sflag, size = 0x4, scoped, tag = 'scoped memory for critic_forward.1']
    %15 = vsyncpa [#allocation5], 0
    %16 = vsyncpa [#allocation7], 0
    %17 = vsyncpa [#allocation10], 0
    // Predicated region
    $region2: #{critic_forward.1} parent=1 // pred_check
      _
    $region3: #{critic_forward.1} parent=1 // pred_check_branch
      %19 = sbr.rel (0) target = $region5
    $region4: #{critic_forward.1} parent=1 // pred_region
      _
    $region5: #{critic_forward.1} parent=1 // pred_fallthru
      _
    // Predicated region
    $region6: #{critic_forward.1} parent=1 // pred_check
      _
    $region7: #{critic_forward.1} parent=1 // pred_check_branch
      %21 = sbr.rel (0) target = $region9
    $region8: #{critic_forward.1} parent=1 // pred_region
      %23 = vsyncadd [#allocation5], 0
      %s25 = sshll.u32 %s1, 4
      %s26 = int_to_ptr.hbm [resolvable:$true] %s25
      %s27 = sshll.u32 [#allocation4], 4
      %s28 = int_to_ptr.vmem [resolvable:$true] %s27
      %30 = dma.hbm_to_vmem [thread:$0]  %s26, 32, %s28, [#allocation5]
    $region9: #{critic_forward.1} parent=1 // pred_fallthru
      _
    // Predicated region
    $region10: #{critic_forward.1} parent=1 // pred_check
      _
    $region11: #{critic_forward.1} parent=1 // pred_check_branch
      %32 = sbr.rel (0) target = $region13
    $region12: #{critic_forward.1} parent=1 // pred_region
      %34 = vsyncadd [#allocation7], 0
      %s35 = sshll.u32 %s2, 4
      %s36 = int_to_ptr.hbm [resolvable:$true] %s35
      %s37 = sshll.u32 [#allocation6], 4
      %s38 = int_to_ptr.vmem [resolvable:$true] %s37
      %43 = dma.hbm_to_vmem [thread:$0]  %s36, 384, %s38, [#allocation7], 128, 128, 8
    $region13: #{critic_forward.1} parent=1 // pred_fallthru
      _
    // Predicated region
    $region14: #{critic_forward.1} parent=1 // pred_check
      _
    $region15: #{critic_forward.1} parent=1 // pred_check_branch
      %45 = sbr.rel (0) target = $region17
    $region16: #{critic_forward.1} parent=1 // pred_region
      _
    $region17: #{critic_forward.1} parent=1 // pred_fallthru
      _
    // Predicated region
    $region18: #{critic_forward.1} parent=1 // pred_check
      _
    $region19: #{critic_forward.1} parent=1 // pred_check_branch
      %47 = sbr.rel (0) target = $region21
    $region20: #{critic_forward.1} parent=1 // pred_region
      %49 = vsyncadd [#allocation7], 0
      %s50 = sshll.u32 %s4, 4
      %s51 = int_to_ptr.hbm [resolvable:$true] %s50
      %s52 = sshll.u32 [#allocation8], 4
      %s53 = int_to_ptr.vmem [resolvable:$true] %s52
      %58 = dma.hbm_to_vmem [thread:$0]  %s51, 4096, %s53, [#allocation7], 128, 128, 8
    $region21: #{critic_forward.1} parent=1 // pred_fallthru
      _
    // Predicated region
    $region22: #{critic_forward.1} parent=1 // pred_check
      _
    $region23: #{critic_forward.1} parent=1 // pred_check_branch
      %60 = sbr.rel (0) target = $region25
    $region24: #{critic_forward.1} parent=1 // pred_region
      _
    $region25: #{critic_forward.1} parent=1 // pred_fallthru
      _
    // Predicated region
    $region26: #{critic_forward.1} parent=1 // pred_check
      _
    $region27: #{critic_forward.1} parent=1 // pred_check_branch
      %62 = sbr.rel (0) target = $region29
    $region28: #{critic_forward.1} parent=1 // pred_region
      %64 = vsyncadd [#allocation10], 0
      %s66 = sshll.u32 %s6, 4
      %s67 = int_to_ptr.hbm [resolvable:$true] %s66
      %s68 = sshll.u32 [#allocation9], 4
      %s69 = int_to_ptr.vmem [resolvable:$true] %s68
      %71 = dma.hbm_to_vmem [thread:$0]  %s67, 32, %s69, [#allocation10]
    $region29: #{critic_forward.1} parent=1 // pred_fallthru
      _
    // Predicated region
    $region30: #{critic_forward.1} parent=1 // pred_check
      _
    $region31: #{critic_forward.1} parent=1 // pred_check_branch
      %73 = sbr.rel (0) target = $region33
    $region32: #{critic_forward.1} parent=1 // pred_region
      _
    $region33: #{critic_forward.1} parent=1 // pred_fallthru
      _
    // Predicated region
    $region34: #{critic_forward.1} parent=1 // pred_check
      _
    $region35: #{critic_forward.1} parent=1 // pred_check_branch
      %75 = sbr.rel (0) target = $region37
    $region36: #{critic_forward.1} parent=1 // pred_region
      %77 = dma.done [#allocation5], 32
    $region37: #{critic_forward.1} parent=1 // pred_fallthru
      _
    // Predicated region
    $region38: #{critic_forward.1} parent=1 // pred_check
      _
    $region39: #{critic_forward.1} parent=1 // pred_check_branch
      %79 = sbr.rel (0) target = $region41
    $region40: #{critic_forward.1} parent=1 // pred_region
      %81 = dma.done [#allocation7], 384
    $region41: #{critic_forward.1} parent=1 // pred_fallthru
      _
    // Predicated region
    $region42: #{critic_forward.1} parent=1 // pred_check
      _
    $region43: #{critic_forward.1} parent=1 // pred_check_branch
      %83 = sbr.rel (0) target = $region45
    $region44: #{critic_forward.1} parent=1 // pred_region
      %85 = dma.done [#allocation7], 4096
    $region45: #{critic_forward.1} parent=1 // pred_fallthru
      _
    // Predicated region
    $region46: #{critic_forward.1} parent=1 // pred_check
      _
    $region47: #{critic_forward.1} parent=1 // pred_check_branch
      %87 = sbr.rel (0) target = $region49
    $region48: #{critic_forward.1} parent=1 // pred_region
      %89 = dma.done [#allocation10], 32
    $region49: #{critic_forward.1} parent=1 // pred_fallthru
      _
    %v91 = vld [vmem:[%s0] sm:$0x3]
    %vm92 = vcmask 132096
    %93 = vst.msk [vmem:[#allocation2] sm:$0x3] %vm92, %v91
    %v94 = vld [vmem:[#allocation4] sm:$0x3]
    %96 = vrot.lane.b32.xlu0 %v94, 17
    %v97 = vpop.permute.xlu0 %96
    %vm99 = vcmask 181384
    %100 = vst.msk [vmem:[#allocation2] sm:$0x3] %vm99, %v97
    %v101 = vld [vmem:[#allocation2] sm:$0x3]
    %v102 = vpack.c.bf16 %v101, %v101
    %v103 = vld [vmem:[#allocation6] sm:$0xff]
    %v104 = vld [vmem:[#allocation6 + $0x8] sm:$0xff]
    %v105 = vld [vmem:[#allocation6 + $0x10] sm:$0xff]
    %v106 = vld [vmem:[%s3] sm:$0x3]
    %v108 = vperm.slane %v106, 0
    %v109 = vperm.slane %v106, 1
    %v115 = vunpack.c.l.b16 %v103
    %v116 = vunpack.c.h.b16 %v103
    %v117 = vunpack.c.l.b16 %v104
    %v118 = vunpack.c.h.b16 %v104
    %v119 = vunpack.c.l.b16 %v105
    %v120 = vunpack.c.h.b16 %v105
    %v121 = vpack.c.b16 %v117, %v115
    %v122 = vpack.c.b16 %v118, %v116
    %v123 = vpack.c.b16 %v119, %v119
    %v124 = vpack.c.b16 %v120, %v120
    %vm127 = vcmask 187392
    %v129 = vsel %vm127, %v102, 0
    %vm131 = vcmask 1042432
    %vm132 = vcmask 1043456
    %v133 = vsel %vm131, 4294967295, 65535
    %v134 = vsel %vm132, %v133, 0
    %v136 = vand.u32 %v123, %v134
    %v139 = vand.u32 %v124, %v134
    %141 = vmatpush.bf16.msra.mxu0 0
    %142 = vmatpush.bf16.msra.mxu0 0
    %143 = vmatpush.bf16.msra.mxu0 0
    %144 = vmatpush.bf16.msra.mxu0 0
    %145 = vmatpush.bf16.msra.mxu0 0
    %146 = vmatpush.bf16.msra.mxu0 0
    %147 = vmatpush.bf16.msra.mxu0 %v136
    %148 = vmatpush.bf16.msra.mxu0 %v121
    %149 = vmatmul.bf16.gmra.mxu0 %v129
    %v150 = vpop.f32.mrf.mxu0
    %v151 = vadd.f32 %v108, %v150
    %v152 = vpop.f32.mrf.mxu0
    %153 = vdwg.mxu0
    %154 = vmatpush.bf16.msra.mxu0 0
    %155 = vmatpush.bf16.msra.mxu0 0
    %156 = vmatpush.bf16.msra.mxu0 0
    %157 = vmatpush.bf16.msra.mxu0 0
    %158 = vmatpush.bf16.msra.mxu0 0
    %159 = vmatpush.bf16.msra.mxu0 0
    %160 = vmatpush.bf16.msra.mxu0 %v139
    %161 = vmatpush.bf16.msra.mxu0 %v122
    %162 = vmatmul.bf16.gmra.mxu0 %v129
    %v163 = vpop.f32.mrf.mxu0
    %v164 = vadd.f32 %v109, %v163
    %v165 = vpop.f32.mrf.mxu0
    %166 = vdwg.mxu0
    %v167 = vmax.f32 %v151, 0.0
    %v168 = vmax.f32 %v164, 0.0
    %v169 = vpack.c.bf16 %v167, %v167
    %v170 = vpack.c.bf16 %v168, %v168
    %v171 = vld [vmem:[#allocation8] sm:$0xff]
    %v172 = vld [vmem:[#allocation8 + $0x8] sm:$0xff]
    %v173 = vld [vmem:[#allocation8 + $0x10] sm:$0xff]
    %v174 = vld [vmem:[#allocation8 + $0x18] sm:$0xff]
    %v175 = vld [vmem:[#allocation8 + $0x20] sm:$0xff]
    %v176 = vld [vmem:[#allocation8 + $0x28] sm:$0xff]
    %v177 = vld [vmem:[#allocation8 + $0x30] sm:$0xff]
    %v178 = vld [vmem:[#allocation8 + $0x38] sm:$0xff]
    %v179 = vld [vmem:[#allocation8 + $0x40] sm:$0xff]
    %v180 = vld [vmem:[#allocation8 + $0x48] sm:$0xff]
    %v181 = vld [vmem:[#allocation8 + $0x50] sm:$0xff]
    %v182 = vld [vmem:[#allocation8 + $0x58] sm:$0xff]
    %v183 = vld [vmem:[#allocation8 + $0x60] sm:$0xff]
    %v184 = vld [vmem:[#allocation8 + $0x68] sm:$0xff]
    %v185 = vld [vmem:[#allocation8 + $0x70] sm:$0xff]
    %v186 = vld [vmem:[#allocation8 + $0x78] sm:$0xff]
    %v187 = vld [vmem:[#allocation8 + $0x80] sm:$0xff]
    %v188 = vld [vmem:[#allocation8 + $0x88] sm:$0xff]
    %v189 = vld [vmem:[#allocation8 + $0x90] sm:$0xff]
    %v190 = vld [vmem:[#allocation8 + $0x98] sm:$0xff]
    %v191 = vld [vmem:[#allocation8 + $0xa0] sm:$0xff]
    %v192 = vld [vmem:[#allocation8 + $0xa8] sm:$0xff]
    %v193 = vld [vmem:[#allocation8 + $0xb0] sm:$0xff]
    %v194 = vld [vmem:[#allocation8 + $0xb8] sm:$0xff]
    %v195 = vld [vmem:[#allocation8 + $0xc0] sm:$0xff]
    %v196 = vld [vmem:[#allocation8 + $0xc8] sm:$0xff]
    %v197 = vld [vmem:[#allocation8 + $0xd0] sm:$0xff]
    %v198 = vld [vmem:[#allocation8 + $0xd8] sm:$0xff]
    %v199 = vld [vmem:[#allocation8 + $0xe0] sm:$0xff]
    %v200 = vld [vmem:[#allocation8 + $0xe8] sm:$0xff]
    %v201 = vld [vmem:[#allocation8 + $0xf0] sm:$0xff]
    %v202 = vld [vmem:[#allocation8 + $0xf8] sm:$0xff]
    %v203 = vld [vmem:[%s5] sm:$0x3]
    %v205 = vperm.slane %v203, 0
    %v206 = vperm.slane %v203, 1
    %v241 = vunpack.c.l.b16 %v171
    %v242 = vunpack.c.h.b16 %v171
    %v243 = vunpack.c.l.b16 %v172
    %v244 = vunpack.c.h.b16 %v172
    %v245 = vunpack.c.l.b16 %v173
    %v246 = vunpack.c.h.b16 %v173
    %v247 = vunpack.c.l.b16 %v174
    %v248 = vunpack.c.h.b16 %v174
    %v249 = vunpack.c.l.b16 %v175
    %v250 = vunpack.c.h.b16 %v175
    %v251 = vunpack.c.l.b16 %v176
    %v252 = vunpack.c.h.b16 %v176
    %v253 = vunpack.c.l.b16 %v177
    %v254 = vunpack.c.h.b16 %v177
    %v255 = vunpack.c.l.b16 %v178
    %v256 = vunpack.c.h.b16 %v178
    %v257 = vunpack.c.l.b16 %v179
    %v258 = vunpack.c.h.b16 %v179
    %v259 = vunpack.c.l.b16 %v180
    %v260 = vunpack.c.h.b16 %v180
    %v261 = vunpack.c.l.b16 %v181
    %v262 = vunpack.c.h.b16 %v181
    %v263 = vunpack.c.l.b16 %v182
    %v264 = vunpack.c.h.b16 %v182
    %v265 = vunpack.c.l.b16 %v183
    %v266 = vunpack.c.h.b16 %v183
    %v267 = vunpack.c.l.b16 %v184
    %v268 = vunpack.c.h.b16 %v184
    %v269 = vunpack.c.l.b16 %v185
    %v270 = vunpack.c.h.b16 %v185
    %v271 = vunpack.c.l.b16 %v186
    %v272 = vunpack.c.h.b16 %v186
    %v273 = vunpack.c.l.b16 %v187
    %v274 = vunpack.c.h.b16 %v187
    %v275 = vunpack.c.l.b16 %v188
    %v276 = vunpack.c.h.b16 %v188
    %v277 = vunpack.c.l.b16 %v189
    %v278 = vunpack.c.h.b16 %v189
    %v279 = vunpack.c.l.b16 %v190
    %v280 = vunpack.c.h.b16 %v190
    %v281 = vunpack.c.l.b16 %v191
    %v282 = vunpack.c.h.b16 %v191
    %v283 = vunpack.c.l.b16 %v192
    %v284 = vunpack.c.h.b16 %v192
    %v285 = vunpack.c.l.b16 %v193
    %v286 = vunpack.c.h.b16 %v193
    %v287 = vunpack.c.l.b16 %v194
    %v288 = vunpack.c.h.b16 %v194
    %v289 = vunpack.c.l.b16 %v195
    %v290 = vunpack.c.h.b16 %v195
    %v291 = vunpack.c.l.b16 %v196
    %v292 = vunpack.c.h.b16 %v196
    %v293 = vunpack.c.l.b16 %v197
    %v294 = vunpack.c.h.b16 %v197
    %v295 = vunpack.c.l.b16 %v198
    %v296 = vunpack.c.h.b16 %v198
    %v297 = vunpack.c.l.b16 %v199
    %v298 = vunpack.c.h.b16 %v199
    %v299 = vunpack.c.l.b16 %v200
    %v300 = vunpack.c.h.b16 %v200
    %v301 = vunpack.c.l.b16 %v201
    %v302 = vunpack.c.h.b16 %v201
    %v303 = vunpack.c.l.b16 %v202
    %v304 = vunpack.c.h.b16 %v202
    %v305 = vpack.c.b16 %v243, %v241
    %v306 = vpack.c.b16 %v244, %v242
    %v307 = vpack.c.b16 %v247, %v245
    %v308 = vpack.c.b16 %v248, %v246
    %v309 = vpack.c.b16 %v251, %v249
    %v310 = vpack.c.b16 %v252, %v250
    %v311 = vpack.c.b16 %v255, %v253
    %v312 = vpack.c.b16 %v256, %v254
    %v313 = vpack.c.b16 %v259, %v257
    %v314 = vpack.c.b16 %v260, %v258
    %v315 = vpack.c.b16 %v263, %v261
    %v316 = vpack.c.b16 %v264, %v262
    %v317 = vpack.c.b16 %v267, %v265
    %v318 = vpack.c.b16 %v268, %v266
    %v319 = vpack.c.b16 %v271, %v269
    %v320 = vpack.c.b16 %v272, %v270
    %v321 = vpack.c.b16 %v275, %v273
    %v322 = vpack.c.b16 %v276, %v274
    %v323 = vpack.c.b16 %v279, %v277
    %v324 = vpack.c.b16 %v280, %v278
    %v325 = vpack.c.b16 %v283, %v281
    %v326 = vpack.c.b16 %v284, %v282
    %v327 = vpack.c.b16 %v287, %v285
    %v328 = vpack.c.b16 %v288, %v286
    %v329 = vpack.c.b16 %v291, %v289
    %v330 = vpack.c.b16 %v292, %v290
    %v331 = vpack.c.b16 %v295, %v293
    %v332 = vpack.c.b16 %v296, %v294
    %v333 = vpack.c.b16 %v299, %v297
    %v334 = vpack.c.b16 %v300, %v298
    %v335 = vpack.c.b16 %v303, %v301
    %v336 = vpack.c.b16 %v304, %v302
    %369 = vmatpush.bf16.msra.mxu0 %v319
    %370 = vmatpush.bf16.msra.mxu0 %v317
    %371 = vmatpush.bf16.msra.mxu0 %v315
    %372 = vmatpush.bf16.msra.mxu0 %v313
    %373 = vmatpush.bf16.msra.mxu0 %v311
    %374 = vmatpush.bf16.msra.mxu0 %v309
    %375 = vmatpush.bf16.msra.mxu0 %v307
    %376 = vmatpush.bf16.msra.mxu0 %v305
    %377 = vmatmul.bf16.gmra.mxu0 %v169
    %v378 = vpop.f32.mrf.mxu0
    %v379 = vadd.f32 %v205, %v378
    %v380 = vpop.f32.mrf.mxu0
    %381 = vdwg.mxu0
    %382 = vmatpush.bf16.msra.mxu0 %v335
    %383 = vmatpush.bf16.msra.mxu0 %v333
    %384 = vmatpush.bf16.msra.mxu0 %v331
    %385 = vmatpush.bf16.msra.mxu0 %v329
    %386 = vmatpush.bf16.msra.mxu0 %v327
    %387 = vmatpush.bf16.msra.mxu0 %v325
    %388 = vmatpush.bf16.msra.mxu0 %v323
    %389 = vmatpush.bf16.msra.mxu0 %v321
    %390 = vmatmul.bf16.gmra.mxu0 %v170
    %v391 = vpop.f32.mrf.mxu0
    %v392 = vadd.f32 %v379, %v391
    %v393 = vpop.f32.mrf.mxu0
    %394 = vdwg.mxu0
    %395 = vmatpush.bf16.msra.mxu0 %v320
    %396 = vmatpush.bf16.msra.mxu0 %v318
    %397 = vmatpush.bf16.msra.mxu0 %v316
    %398 = vmatpush.bf16.msra.mxu0 %v314
    %399 = vmatpush.bf16.msra.mxu0 %v312
    %400 = vmatpush.bf16.msra.mxu0 %v310
    %401 = vmatpush.bf16.msra.mxu0 %v308
    %402 = vmatpush.bf16.msra.mxu0 %v306
    %403 = vmatmul.bf16.gmra.mxu0 %v169
    %v404 = vpop.f32.mrf.mxu0
    %v405 = vadd.f32 %v206, %v404
    %v406 = vpop.f32.mrf.mxu0
    %407 = vdwg.mxu0
    %408 = vmatpush.bf16.msra.mxu0 %v336
    %409 = vmatpush.bf16.msra.mxu0 %v334
    %410 = vmatpush.bf16.msra.mxu0 %v332
    %411 = vmatpush.bf16.msra.mxu0 %v330
    %412 = vmatpush.bf16.msra.mxu0 %v328
    %413 = vmatpush.bf16.msra.mxu0 %v326
    %414 = vmatpush.bf16.msra.mxu0 %v324
    %415 = vmatpush.bf16.msra.mxu0 %v322
    %416 = vmatmul.bf16.gmra.mxu0 %v170
    %v417 = vpop.f32.mrf.mxu0
    %v418 = vadd.f32 %v405, %v417
    %v419 = vpop.f32.mrf.mxu0
    %420 = vdwg.mxu0
    %v421 = vmax.f32 %v392, 0.0
    %v422 = vmax.f32 %v418, 0.0
    %v423 = vld [vmem:[#allocation9] sm:$0x3]
    %v425 = vperm.slane %v423, 0
    %v426 = vperm.slane %v423, 1
    %v429 = vmul.f32 %v421, %v425
    %v430 = vmul.f32 %v422, %v426
    %vm431 = vcmask 1041408
    %v432 = vsel %vm431, %v429, 0.0
    %v433 = vsel %vm431, %v430, 0.0
    %v434 = vadd.f32 %v432, %v433
    %435 = vadd.xlane.f32.xlu0 %v434
    %v436 = vpop.xlane.xlu0 %435
    %v437 = vld [vmem:[#allocation3] sm:$0x1]
    %v439 = vperm.slane %v437, 0
    %v441 = vadd.f32 %v436, %v439
    %vm442 = vcmask 1024
    %443 = vst.msk [vmem:[%s8] sm:$0x3] %vm442, %v441
    // Predicated region
    $region50: #{critic_forward.1} parent=1 // pred_check
      _
    $region51: #{critic_forward.1} parent=1 // pred_check_branch
      %445 = sbr.rel (0) target = $region53
    $region52: #{critic_forward.1} parent=1 // pred_region
      _
    $region53: #{critic_forward.1} parent=1 // pred_fallthru
      _
    // Predicated region
    $region54: #{critic_forward.1} parent=1 // pred_check
      _
    $region55: #{critic_forward.1} parent=1 // pred_check_branch
      %447 = sbr.rel (0) target = $region57
    $region56: #{critic_forward.1} parent=1 // pred_region
      _
    $region57: #{critic_forward.1} parent=1 // pred_fallthru
      _
    %448 = vsyncpa [#allocation5], 1
    %449 = vsyncpa [#allocation7], 1
    %450 = vsyncpa [#allocation10], 1

</llo_original>
